<compile_context>
chip_gen: v7x
topology: tpu7x:2x2x1
jax: 0.10.0
libtpu: 0.0.40
codegen_flags: <defaults>
</compile_context>

<pallas_src>
import jax
import jax.numpy as jnp
from jax.experimental import pallas as pl
from jax.experimental.pallas import tpu as pltpu


def _round_up(n, m):
    return ((n + m - 1) // m) * m


def _device_kind():
    try:
        return jax.devices()[0].device_kind.lower()
    except Exception:
        return ""


def _num_tensorcores(kind):
    # v7x exposes 2 TensorCores per chip; v4 (and v5p) megacore also shards
    # "parallel" grid axes across 2 cores.  Conservative default: 1.
    return 2 if ("v7" in kind or "v4" in kind or "v5p" in kind) else 1


def _has_bf16_valu(kind):
    # v6e / v7x VPUs have bf16 VALU lanes; v5e (and older) do not.
    return ("v6" in kind) or ("v7" in kind)


def _choose_tile(batch, tile_cap, num_tc):
    """Pick a lane-dense (multiple-of-128) batch tile.

    Single-TC chips get the largest tile that fits the cap (fewest grid steps).
    On 2-TC chips we only rebalance to an even step count if that keeps the
    tile >= 512 lanes (never shrink the MXU RHS lane width just to split).
    """
    cap = max(128, (int(tile_cap) // 128) * 128)
    b128 = _round_up(max(int(batch), 1), 128)
    tile = min(cap, b128)
    if num_tc > 1:
        n = pl.cdiv(batch, tile)
        if n % 2 == 1:
            n_even = 2 if n == 1 else n + 1
            t2 = _round_up(-(-batch // n_even), 128)
            if t2 >= 512:
                tile = t2
    return tile


def _vmem_limit_bytes(tile, x_dim, n_neurons, param_bytes):
    """Generous footprint estimate; clamped to [32 MiB, 48 MiB] (safe on all gens)."""
    x_block = tile * x_dim * 4          # f32 input block (double-buffered)
    out_block = tile * 4                # f32 output row block
    act = tile * max(n_neurons, x_dim, 1) * 4
    est = 2 * (x_block + out_block) + 2 * param_bytes + 6 * act
    est = int(1.5 * est) + (8 << 20)
    return int(max(32 << 20, min(est, 48 << 20)))


def _make_mlp_kernel(n_hidden, ew_bf16):
    """Kernel body. Activations are (features, tile_b): batch on the lane axis."""
    # TODO(synk): nn.Dropout is modeled in eval mode (identity); training-mode
    # stochastic dropout would use pltpu.prng_seed/prng_random_bits.
    def kernel(*refs):
        x_ref = refs[0]                            # (tile_b, x_dim) f32
        o_ref = refs[-1]                           # (1, tile_b)     f32
        # Put the batch on the lane axis + cast to the MXU operand dtype.
        h = x_ref[...].T.astype(jnp.bfloat16)      # (x_dim, tile_b) bf16
        idx = 1
        for _ in range(n_hidden):
            w = refs[idx][...]                     # (out, in)  bf16
            b = refs[idx + 1][...]                 # (out, 1)   bf16 (v6e/v7x) or f32 (v5e)
            idx += 2
            # MXU matmul: bf16 operands, f32 accumulation.
            acc = jnp.dot(w, h.astype(jnp.bfloat16),
                          preferred_element_type=jnp.float32)
            if ew_bf16:
                h = jnp.maximum(acc.astype(jnp.bfloat16) + b, 0.0)   # bf16 VPU
            else:
                h = jnp.maximum(acc + b, 0.0)                        # f32 VPU
        w_out = refs[idx][...]                     # (n_neurons, 1) f32
        b_out = refs[idx + 1][...]                 # (1, 1)         f32
        # Final n->1 projection: VPU multiply + sublane reduction, f32.
        o_ref[...] = jnp.sum(h.astype(jnp.float32) * w_out,
                             axis=0, keepdims=True) + b_out

    return kernel


def dnn_forward(x, params, *, tile_b=1024):
    """Pallas implementation of DNN.forward.

    params: dict with
      'beta'        (z_dim,)
      'gamma_tilde' (n_splines_H,)
      'Ws'          list of hidden weights, each (in, n_neurons)
      'bs'          list of hidden biases, each (1, n_neurons)
      'W_out'       (n_neurons, 1)
      'b_out'       (1, 1)
    Returns (beta, gamma_tilde, gx) with gx of shape (batch,), matching
    torch.squeeze(self.model(x), dim=1).
    """
    x = jnp.asarray(x, jnp.float32)
    B, x_dim = x.shape
    n_hidden = len(params["Ws"])

    kind = _device_kind()
    num_tc = _num_tensorcores(kind)
    ew_bf16 = _has_bf16_valu(kind)
    ew_dtype = jnp.bfloat16 if ew_bf16 else jnp.float32

    tile = _choose_tile(B, tile_b, num_tc)
    n_steps = pl.cdiv(B, tile)

    kernel = _make_mlp_kernel(n_hidden, ew_bf16)

    # x in natural layout: (tile, x_dim) blocks over the batch axis.
    in_specs = [pl.BlockSpec((tile, x_dim), lambda i: (i, 0))]
    flat_params = []
    for W, b in zip(params["Ws"], params["bs"]):
        Wt = jnp.asarray(W).T.astype(jnp.bfloat16)        # (out, in), PyTorch layout
        bt = jnp.asarray(b).T.astype(ew_dtype)            # (out, 1)
        in_specs.append(pl.BlockSpec(Wt.shape, lambda i: (0, 0)))
        in_specs.append(pl.BlockSpec(bt.shape, lambda i: (0, 0)))
        flat_params += [Wt, bt]
    w_out = jnp.asarray(params["W_out"]).astype(jnp.float32)   # (n_neurons, 1)
    b_out = jnp.asarray(params["b_out"]).astype(jnp.float32)   # (1, 1)
    in_specs.append(pl.BlockSpec(w_out.shape, lambda i: (0, 0)))
    in_specs.append(pl.BlockSpec(b_out.shape, lambda i: (0, 0)))
    flat_params += [w_out, b_out]

    out_spec = pl.BlockSpec((1, tile), lambda i: (0, i))

    n_neurons = int(w_out.shape[0])
    param_bytes = sum(int(p.size) * p.dtype.itemsize for p in flat_params)

    # Advisory cost hint so XLA schedules around the custom call sensibly.
    dims = [x_dim] + [int(W.shape[1]) for W in params["Ws"]]
    flops_per_row = sum(2 * a * b for a, b in zip(dims[:-1], dims[1:])) + 2 * dims[-1]
    bytes_accessed = int(x.size) * 4 + param_bytes + B * 4
    cost = pl.CostEstimate(flops=int(flops_per_row) * int(B),
                           transcendentals=0,
                           bytes_accessed=int(bytes_accessed))

    gx_row = pl.pallas_call(
        kernel,
        out_shape=jax.ShapeDtypeStruct((1, B), jnp.float32),
        grid=(n_steps,),
        in_specs=in_specs,
        out_specs=out_spec,
        compiler_params=pltpu.CompilerParams(
            dimension_semantics=("parallel",),
            vmem_limit_bytes=_vmem_limit_bytes(tile, x_dim, n_neurons, param_bytes),
        ),
        cost_estimate=cost,
    )(x, *flat_params)

    gx = gx_row[0]   # (B,), matches torch.squeeze(..., dim=1)
    return params["beta"], params["gamma_tilde"], gx


def init_params(key, z_dim, x_dim, n_splines_H, n_hidden, n_neurons):
    """Deterministic parameter init mirroring the module's __init__ shapes."""
    keys = jax.random.split(key, 2 * (n_hidden + 1))
    params = {
        "beta": jnp.zeros((z_dim,), jnp.float32),               # nn.Parameter(torch.zeros(z_dim))
        "gamma_tilde": -jnp.ones((n_splines_H,), jnp.float32),  # -torch.ones(n_splines_H)
        "Ws": [],
        "bs": [],
    }
    in_dim = x_dim
    k_idx = 0
    for _ in range(n_hidden):
        scale = 1.0 / jnp.sqrt(in_dim)
        W = scale * jax.random.normal(keys[k_idx], (in_dim, n_neurons), jnp.float32)
        b = scale * jax.random.normal(keys[k_idx + 1], (1, n_neurons), jnp.float32)
        params["Ws"].append(W)
        params["bs"].append(b)
        in_dim = n_neurons
        k_idx += 2
    scale = 1.0 / jnp.sqrt(in_dim)
    params["W_out"] = scale * jax.random.normal(keys[k_idx], (in_dim, 1), jnp.float32)
    params["b_out"] = scale * jax.random.normal(keys[k_idx + 1], (1, 1), jnp.float32)
    return params


def _reference_forward(x, params, *, matmul_dtype=jnp.float32, ew_dtype=jnp.float32):
    """Pure-JAX reference. matmul_dtype/ew_dtype mirror the kernel's dtypes."""
    h = x
    for W, b in zip(params["Ws"], params["bs"]):
        acc = jnp.dot(h.astype(matmul_dtype), W.astype(matmul_dtype),
                      preferred_element_type=jnp.float32,
                      precision=jax.lax.Precision.HIGHEST)
        if ew_dtype == jnp.bfloat16:
            h = jnp.maximum(acc.astype(jnp.bfloat16) + b.astype(jnp.bfloat16), 0.0)
        else:
            h = jnp.maximum(acc + b, 0.0)
    # Final projection elementwise in f32 (avoids TPU default-precision matmul).
    out = (jnp.sum(h.astype(jnp.float32) * params["W_out"][:, 0][None, :], axis=1)
           + params["b_out"][0, 0])
    return params["beta"], params["gamma_tilde"], out


if __name__ == "__main__":
    # Small shapes consistent with the module's forward.
    z_dim, x_dim, n_splines_H, n_hidden, n_neurons, p_dropout = 4, 16, 5, 2, 32, 0.1

    key = jax.random.PRNGKey(0)
    k_x, k_p = jax.random.split(key)
    params = init_params(k_p, z_dim, x_dim, n_splines_H, n_hidden, n_neurons)

    # Mirror the kernel's chip-dependent elementwise dtype in the tight check.
    ew_dtype = jnp.bfloat16 if _has_bf16_valu(_device_kind()) else jnp.float32

    # batches exercise: single partial block (16), exact single block (384),
    # and a multi-step grid with a partial last block (1300).
    for batch in (16, 384, 1300):
        x = jax.random.normal(jax.random.fold_in(k_x, batch), (batch, x_dim), jnp.float32)

        beta, gamma_tilde, gx = dnn_forward(x, params, tile_b=1024)
        jax.block_until_ready(gx)

        assert gx.shape == (batch,)
        assert beta.shape == (z_dim,)
        assert gamma_tilde.shape == (n_splines_H,)

        # Tight check against a reference that mirrors the kernel's dtypes.
        _, _, gx_mirror = _reference_forward(x, params,
                                             matmul_dtype=jnp.bfloat16,
                                             ew_dtype=ew_dtype)
        assert jnp.allclose(gx, gx_mirror, atol=5e-3, rtol=5e-3), (
            "mirrored-ref mismatch", float(jnp.max(jnp.abs(gx - gx_mirror))))

        # Loose check against the full-f32 reference (bf16 operands => looser tol).
        _, _, gx_f32 = _reference_forward(x, params)
        assert jnp.allclose(gx, gx_f32, atol=5e-2, rtol=5e-2), (
            "f32-ref mismatch", float(jnp.max(jnp.abs(gx - gx_f32))))

    print("KERNEL_OK")
</pallas_src>

<mosaic_0001>
module attributes {stable_mosaic.version = 11 : i64} {
  func.func @kernel(%arg0: i32, %arg1: memref<128x16xf32, #tpu.memory_space<vmem>>, %arg2: memref<32x16xbf16, #tpu.memory_space<vmem>>, %arg3: memref<32x1xf32, #tpu.memory_space<vmem>>, %arg4: memref<32x32xbf16, #tpu.memory_space<vmem>>, %arg5: memref<32x1xf32, #tpu.memory_space<vmem>>, %arg6: memref<32x1xf32, #tpu.memory_space<vmem>>, %arg7: memref<1x1xf32, #tpu.memory_space<vmem>>, %arg8: memref<1x128xf32, #tpu.memory_space<vmem>>) attributes {dimension_semantics = [#tpu.dimension_semantics<parallel>], iteration_bounds = array<i64: 1>, scalar_prefetch = 0 : i64, scratch_operands = 0 : i64, tpu.core_type = #tpu.core_type<tc>, window_params = [{transform_indices = @transform_0, window_bounds = array<i64: 128, 16>}, {pipeline_mode = #tpu.pipeline_mode<synchronous>, transform_indices = @transform_1, window_bounds = array<i64: 32, 16>}, {pipeline_mode = #tpu.pipeline_mode<synchronous>, transform_indices = @transform_2, window_bounds = array<i64: 32, 1>}, {pipeline_mode = #tpu.pipeline_mode<synchronous>, transform_indices = @transform_3, window_bounds = array<i64: 32, 32>}, {pipeline_mode = #tpu.pipeline_mode<synchronous>, transform_indices = @transform_4, window_bounds = array<i64: 32, 1>}, {pipeline_mode = #tpu.pipeline_mode<synchronous>, transform_indices = @transform_5, window_bounds = array<i64: 32, 1>}, {pipeline_mode = #tpu.pipeline_mode<synchronous>, transform_indices = @transform_6, window_bounds = array<i64: 1, 1>}, {transform_indices = @transform_7, window_bounds = array<i64: 1, 128>}]} {
    %c0 = arith.constant 0 : index
    %c0_0 = arith.constant 0 : index
    %0 = vector.load %arg1[%c0, %c0_0] : memref<128x16xf32, #tpu.memory_space<vmem>>, vector<128x16xf32>
    %1 = tpu.transpose %0, [1, 0] : vector<128x16xf32> -> vector<16x128xf32>
    %2 = arith.truncf %1 : vector<16x128xf32> to vector<16x128xbf16>
    %c0_1 = arith.constant 0 : index
    %c0_2 = arith.constant 0 : index
    %3 = vector.load %arg2[%c0_1, %c0_2] : memref<32x16xbf16, #tpu.memory_space<vmem>>, vector<32x16xbf16>
    %c0_3 = arith.constant 0 : index
    %c0_4 = arith.constant 0 : index
    %4 = vector.load %arg3[%c0_3, %c0_4] : memref<32x1xf32, #tpu.memory_space<vmem>>, vector<32x1xf32>
    %cst = arith.constant dense<0.000000e+00> : vector<32x128xf32>
    %5 = tpu.matmul %3, %2, %cst {dimension_numbers = #tpu.dot_dimension_numbers<[1], [0], [0], [1], [0, 0, 1, 1], [], []>} : vector<32x16xbf16>, vector<16x128xbf16>, vector<32x128xf32> -> vector<32x128xf32>
    %6 = vector.broadcast %4 : vector<32x1xf32> to vector<32x128xf32>
    %7 = arith.addf %5, %6 : vector<32x128xf32>
    %cst_5 = arith.constant 0.000000e+00 : f32
    %8 = vector.broadcast %cst_5 : f32 to vector<32x128xf32>
    %9 = arith.maximumf %7, %8 : vector<32x128xf32>
    %c0_6 = arith.constant 0 : index
    %c0_7 = arith.constant 0 : index
    %10 = vector.load %arg4[%c0_6, %c0_7] : memref<32x32xbf16, #tpu.memory_space<vmem>>, vector<32x32xbf16>
    %c0_8 = arith.constant 0 : index
    %c0_9 = arith.constant 0 : index
    %11 = vector.load %arg5[%c0_8, %c0_9] : memref<32x1xf32, #tpu.memory_space<vmem>>, vector<32x1xf32>
    %12 = arith.truncf %9 : vector<32x128xf32> to vector<32x128xbf16>
    %cst_10 = arith.constant dense<0.000000e+00> : vector<32x128xf32>
    %13 = tpu.matmul %10, %12, %cst_10 {dimension_numbers = #tpu.dot_dimension_numbers<[1], [0], [0], [1], [0, 0, 1, 1], [], []>} : vector<32x32xbf16>, vector<32x128xbf16>, vector<32x128xf32> -> vector<32x128xf32>
    %14 = vector.broadcast %11 : vector<32x1xf32> to vector<32x128xf32>
    %15 = arith.addf %13, %14 : vector<32x128xf32>
    %cst_11 = arith.constant 0.000000e+00 : f32
    %16 = vector.broadcast %cst_11 : f32 to vector<32x128xf32>
    %17 = arith.maximumf %15, %16 : vector<32x128xf32>
    %c0_12 = arith.constant 0 : index
    %c0_13 = arith.constant 0 : index
    %18 = vector.load %arg6[%c0_12, %c0_13] : memref<32x1xf32, #tpu.memory_space<vmem>>, vector<32x1xf32>
    %c0_14 = arith.constant 0 : index
    %c0_15 = arith.constant 0 : index
    %19 = vector.load %arg7[%c0_14, %c0_15] : memref<1x1xf32, #tpu.memory_space<vmem>>, vector<1x1xf32>
    %20 = vector.broadcast %18 : vector<32x1xf32> to vector<32x128xf32>
    %21 = arith.mulf %17, %20 : vector<32x128xf32>
    %cst_16 = arith.constant dense<0.000000e+00> : vector<128xf32>
    %22 = vector.multi_reduction <add>, %21, %cst_16 [0] : vector<32x128xf32> to vector<128xf32>
    %23 = vector.shape_cast %22 : vector<128xf32> to vector<1x128xf32>
    %24 = vector.broadcast %19 : vector<1x1xf32> to vector<1x128xf32>
    %25 = arith.addf %23, %24 : vector<1x128xf32>
    %c0_17 = arith.constant 0 : index
    %c0_18 = arith.constant 0 : index
    %26 = vector.load %arg8[%c0_17, %c0_18] : memref<1x128xf32, #tpu.memory_space<vmem>>, vector<1x128xf32>
    tpu.vector_store %arg8[%c0_17, %c0_18], %25 {strides = array<i32>} : memref<1x128xf32, #tpu.memory_space<vmem>>, vector<1x128xf32>,
    return
  }
  func.func @transform_0(%arg0: i32) -> (i32, i32) {
    %c0_i32 = arith.constant 0 : i32
    %c0_i32_0 = arith.constant 0 : i32
    return %arg0, %c0_i32 : i32, i32
  }
  func.func @transform_1(%arg0: i32) -> (i32, i32) {
    %c0_i32 = arith.constant 0 : i32
    %c0_i32_0 = arith.constant 0 : i32
    %c0_i32_1 = arith.constant 0 : i32
    return %c0_i32, %c0_i32_0 : i32, i32
  }
  func.func @transform_2(%arg0: i32) -> (i32, i32) {
    %c0_i32 = arith.constant 0 : i32
    %c0_i32_0 = arith.constant 0 : i32
    %c0_i32_1 = arith.constant 0 : i32
    return %c0_i32, %c0_i32_0 : i32, i32
  }
  func.func @transform_3(%arg0: i32) -> (i32, i32) {
    %c0_i32 = arith.constant 0 : i32
    %c0_i32_0 = arith.constant 0 : i32
    %c0_i32_1 = arith.constant 0 : i32
    return %c0_i32, %c0_i32_0 : i32, i32
  }
  func.func @transform_4(%arg0: i32) -> (i32, i32) {
    %c0_i32 = arith.constant 0 : i32
    %c0_i32_0 = arith.constant 0 : i32
    %c0_i32_1 = arith.constant 0 : i32
    return %c0_i32, %c0_i32_0 : i32, i32
  }
  func.func @transform_5(%arg0: i32) -> (i32, i32) {
    %c0_i32 = arith.constant 0 : i32
    %c0_i32_0 = arith.constant 0 : i32
    %c0_i32_1 = arith.constant 0 : i32
    return %c0_i32, %c0_i32_0 : i32, i32
  }
  func.func @transform_6(%arg0: i32) -> (i32, i32) {
    %c0_i32 = arith.constant 0 : i32
    %c0_i32_0 = arith.constant 0 : i32
    %c0_i32_1 = arith.constant 0 : i32
    return %c0_i32, %c0_i32_0 : i32, i32
  }
  func.func @transform_7(%arg0: i32) -> (i32, i32) {
    %c0_i32 = arith.constant 0 : i32
    %c0_i32_0 = arith.constant 0 : i32
    return %c0_i32, %arg0 : i32, i32
  }
}

</mosaic_0001>

<llo_original>
// kernel: tpu_custom_call.1
$region0: #{tpu_custom_call.1}
  #allocation0 [shape = 'u32[]', space=smem, size = 0x4, offset = 0x4, fixed_abs, tag = 'smem constant byte address 0x4 - core index']
  #allocation1 [shape = 'u32[144,128]{1,0:T(1,128)}', space=vmem, size = 0x12000, scoped, tag = 'internal scratch']
  #allocation2 [shape = 'f32[1,1]{1,0:T(1,128)S(1)}', space=vmem, size = 0x200, scoped, tag = 'scoped memory for tpu_custom_call.1']
  %s0 = inlined_call_operand.vmem [shape: f32[16,16], index: 0, kind: input, shape index: {}]
  %s1 = inlined_call_operand.vmem [shape: bf16[32,16], index: 1, kind: input, shape index: {}]
  %s2 = inlined_call_operand.vmem [shape: f32[32,1], index: 2, kind: input, shape index: {}]
  %s3 = inlined_call_operand.vmem [shape: bf16[32,32], index: 3, kind: input, shape index: {}]
  %s4 = inlined_call_operand.vmem [shape: f32[32,1], index: 4, kind: input, shape index: {}]
  %s5 = inlined_call_operand.vmem [shape: f32[32,1], index: 5, kind: input, shape index: {}]
  %s6 = inlined_call_operand.<no memory space> [shape: f32[1,1], index: 6, kind: input, shape index: {}]
  %s7 = inlined_call_operand.hbm [shape: f32[1,16], index: 7, kind: output, shape index: {}]
  %s8 = sld [smem:[#allocation0]]
  $region38: #{tpu_custom_call.1} parent=0
    _
  %s10 = ssub.s32 1, %s8
  %s11 = scalar_select 0, %s10, %s8
  %v12 = vstv %s6
  %13 = vst [vmem:[#allocation2] sm:$0x1] %v12
  $region1: #{tpu_custom_call.1} parent=0
    #allocation3 [shape = 'u8[512]{0}', space=vmem, size = 0x400, scoped, tag = 'output window, operand 0, single buffered']
    #allocation4 [shape = 's32[1]{0}', space=sflag, size = 0x4, scoped, tag = 'scoped memory for tpu_custom_call.1']
    %14 = vsyncpa [#allocation4], 0
    // Predicated region
    $region2: #{tpu_custom_call.1} parent=1 // pred_check
      _
    $region3: #{tpu_custom_call.1} parent=1 // pred_check_branch
      %16 = sbr.rel (0) target = $region5
    $region4: #{tpu_custom_call.1} parent=1 // pred_region
      _
    $region5: #{tpu_custom_call.1} parent=1 // pred_fallthru
      _
    // Predicated region
    $region6: #{tpu_custom_call.1} parent=1 // pred_check
      _
    $region7: #{tpu_custom_call.1} parent=1 // pred_check_branch
      %18 = sbr.rel (0) target = $region9
    $region8: #{tpu_custom_call.1} parent=1 // pred_region
      _
    $region9: #{tpu_custom_call.1} parent=1 // pred_fallthru
      _
    // Predicated region
    $region10: #{tpu_custom_call.1} parent=1 // pred_check
      _
    $region11: #{tpu_custom_call.1} parent=1 // pred_check_branch
      %20 = sbr.rel (0) target = $region13
    $region12: #{tpu_custom_call.1} parent=1 // pred_region
      _
    $region13: #{tpu_custom_call.1} parent=1 // pred_fallthru
      _
    // Predicated region
    $region14: #{tpu_custom_call.1} parent=1 // pred_check
      _
    $region15: #{tpu_custom_call.1} parent=1 // pred_check_branch
      %22 = sbr.rel (0) target = $region17
    $region16: #{tpu_custom_call.1} parent=1 // pred_region
      _
    $region17: #{tpu_custom_call.1} parent=1 // pred_fallthru
      _
    // Predicated region
    $region18: #{tpu_custom_call.1} parent=1 // pred_check
      _
    $region19: #{tpu_custom_call.1} parent=1 // pred_check_branch
      %24 = sbr.rel (0) target = $region21
    $region20: #{tpu_custom_call.1} parent=1 // pred_region
      _
    $region21: #{tpu_custom_call.1} parent=1 // pred_fallthru
      _
    // Predicated region
    $region22: #{tpu_custom_call.1} parent=1 // pred_check
      _
    $region23: #{tpu_custom_call.1} parent=1 // pred_check_branch
      %26 = sbr.rel (0) target = $region25
    $region24: #{tpu_custom_call.1} parent=1 // pred_region
      _
    $region25: #{tpu_custom_call.1} parent=1 // pred_fallthru
      _
    // Predicated region
    $region26: #{tpu_custom_call.1} parent=1 // pred_check
      _
    $region27: #{tpu_custom_call.1} parent=1 // pred_check_branch
      %28 = sbr.rel (0) target = $region29
    $region28: #{tpu_custom_call.1} parent=1 // pred_region
      _
    $region29: #{tpu_custom_call.1} parent=1 // pred_fallthru
      _
    %v30 = vld [vmem:[%s0] sm:$0xff]
    %v31 = vld [vmem:[%s0 + $0x8] sm:$0xff]
    %v32 = vld [vmem:[%s0 + $0x10] sm:$0xff]
    %v33 = vld [vmem:[%s0 + $0x18] sm:$0xff]
    %v34 = vld [vmem:[%s0 + $0x20] sm:$0xff]
    %v35 = vld [vmem:[%s0 + $0x28] sm:$0xff]
    %v36 = vld [vmem:[%s0 + $0x30] sm:$0xff]
    %v37 = vld [vmem:[%s0 + $0x38] sm:$0xff]
    %v38 = vld [vmem:[%s0 + $0x40] sm:$0xff]
    %v39 = vld [vmem:[%s0 + $0x48] sm:$0xff]
    %v40 = vld [vmem:[%s0 + $0x50] sm:$0xff]
    %v41 = vld [vmem:[%s0 + $0x58] sm:$0xff]
    %v42 = vld [vmem:[%s0 + $0x60] sm:$0xff]
    %v43 = vld [vmem:[%s0 + $0x68] sm:$0xff]
    %v44 = vld [vmem:[%s0 + $0x70] sm:$0xff]
    %v45 = vld [vmem:[%s0 + $0x78] sm:$0xff]
    %46 = vxpose.xlu0.b32.start [1/16] %v30, 128
    %47 = vxpose.xlu0.b32.cont [2/16] %v31, 128
    %48 = vxpose.xlu0.b32.cont [3/16] %v32, 128
    %49 = vxpose.xlu0.b32.cont [4/16] %v33, 128
    %50 = vxpose.xlu0.b32.cont [5/16] %v34, 128
    %51 = vxpose.xlu0.b32.cont [6/16] %v35, 128
    %52 = vxpose.xlu0.b32.cont [7/16] %v36, 128
    %53 = vxpose.xlu0.b32.cont [8/16] %v37, 128
    %54 = vxpose.xlu0.b32.cont [9/16] %v38, 128
    %55 = vxpose.xlu0.b32.cont [10/16] %v39, 128
    %56 = vxpose.xlu0.b32.cont [11/16] %v40, 128
    %57 = vxpose.xlu0.b32.cont [12/16] %v41, 128
    %58 = vxpose.xlu0.b32.cont [13/16] %v42, 128
    %59 = vxpose.xlu0.b32.cont [14/16] %v43, 128
    %60 = vxpose.xlu0.b32.cont [15/16] %v44, 128
    %61 = vxpose.xlu0.b32.end [16/16] %v45, 128
    %v62 = vpop.trf.xlu0
    %v63 = vpop.trf.xlu0
    %v64 = vpop.trf.xlu0
    %v65 = vpop.trf.xlu0
    %v66 = vpop.trf.xlu0
    %v67 = vpop.trf.xlu0
    %v68 = vpop.trf.xlu0
    %v69 = vpop.trf.xlu0
    %v70 = vpop.trf.xlu0
    %v71 = vpop.trf.xlu0
    %v72 = vpop.trf.xlu0
    %v73 = vpop.trf.xlu0
    %v74 = vpop.trf.xlu0
    %v75 = vpop.trf.xlu0
    %v76 = vpop.trf.xlu0
    %v77 = vpop.trf.xlu0
    %v78 = vpack.c.bf16 %v63, %v62
    %v79 = vld [vmem:[%s1] sm:$0xf]
    %v80 = vld [vmem:[%s1 + $0x4] sm:$0xf]
    %v81 = vld [vmem:[%s1 + $0x8] sm:$0xf]
    %v82 = vld [vmem:[%s1 + $0xc] sm:$0xf]
    %v83 = vld [vmem:[%s2] sm:$0xff]
    %v84 = vld [vmem:[%s2 + $0x8] sm:$0xff]
    %v85 = vld [vmem:[%s2 + $0x10] sm:$0xff]
    %v86 = vld [vmem:[%s2 + $0x18] sm:$0xff]
    %88 = vset.pattern.permute.xlu0 0
    %89 = vperm.xlu0 %88, %v83
    %v90 = vpop.permute.xlu0 %89
    %93 = vset.pattern.permute.xlu0 0
    %94 = vperm.xlu0 %93, %v84
    %v95 = vpop.permute.xlu0 %94
    %98 = vset.pattern.permute.xlu0 0
    %99 = vperm.xlu0 %98, %v85
    %v100 = vpop.permute.xlu0 %99
    %103 = vset.pattern.permute.xlu0 0
    %104 = vperm.xlu0 %103, %v86
    %v105 = vpop.permute.xlu0 %104
    %v111 = vunpack.c.l.b16 %v79
    %v112 = vunpack.c.l.b16 %v80
    %v113 = vunpack.c.l.b16 %v81
    %v114 = vunpack.c.l.b16 %v82
    %v115 = vpack.c.b16 %v112, %v111
    %v116 = vpack.c.b16 %v114, %v113
    %vm117 = vcmask 130048
    %v119 = vsel %vm117, %v115, 0
    %v122 = vsel %vm117, %v116, 0
    %124 = vmatprep.subr.bf16.mxu0 0
    %125 = vmatpush1.bf16.msra.mxu0 %v78
    %126 = vmatprep.subr.bf16.mxu0 0
    %127 = vmatpush1.bf16.msra.mxu0 0
    %128 = vmatprep.subr.bf16.mxu0 0
    %129 = vmatpush1.bf16.msra.mxu0 0
    %130 = vmatprep.subr.bf16.mxu0 0
    %131 = vmatpush1.bf16.msra.mxu0 0
    %132 = vmatprep.subr.bf16.mxu0 0
    %133 = vmatpush1.bf16.msra.mxu0 0
    %134 = vmatprep.subr.bf16.mxu0 0
    %135 = vmatpush1.bf16.msra.mxu0 0
    %136 = vmatprep.subr.bf16.mxu0 0
    %137 = vmatpush1.bf16.msra.mxu0 0
    %138 = vmatprep.subr.bf16.mxu0 0
    %139 = vmatpush1.bf16.msra.mxu0 0
    %140 = vmatprep.subr.bf16.mxu0 0
    %141 = vmatpush1.bf16.msra.mxu0 0
    %142 = vmatprep.subr.bf16.mxu0 0
    %143 = vmatpush1.bf16.msra.mxu0 0
    %144 = vmatprep.subr.bf16.mxu0 0
    %145 = vmatpush1.bf16.msra.mxu0 0
    %146 = vmatprep.subr.bf16.mxu0 0
    %147 = vmatpush1.bf16.msra.mxu0 0
    %148 = vmatprep.subr.bf16.mxu0 0
    %149 = vmatpush1.bf16.msra.mxu0 0
    %150 = vmatprep.subr.bf16.mxu0 0
    %151 = vmatpush1.bf16.msra.mxu0 0
    %152 = vmatprep.subr.bf16.mxu0 0
    %153 = vmatpush1.bf16.msra.mxu0 0
    %154 = vmatprep.subr.bf16.mxu0 0
    %155 = vmatpush1.bf16.msra.mxu0 0
    %156 = vmatprep.mubr.bf16.mxu0 0
    %157 = vmatmul.mubr.bf16.gmra.mrb[0].mxu0 %v119
    %v158 = vpop.f32.mrb[0].mxu0
    %v159 = vadd.f32 %v90, %v158
    %v160 = vpop.f32.mrb[0].mxu0
    %v161 = vpop.f32.mrb[0].mxu0
    %v162 = vadd.f32 %v95, %v161
    %v163 = vpop.f32.mrb[0].mxu0
    %164 = vmatprep.mubr.bf16.mxu0 0
    %165 = vmatmul.mubr.bf16.gmra.mrb[0].mxu0 %v122
    %v166 = vpop.f32.mrb[0].mxu0
    %v167 = vadd.f32 %v100, %v166
    %v168 = vpop.f32.mrb[0].mxu0
    %v169 = vpop.f32.mrb[0].mxu0
    %v170 = vadd.f32 %v105, %v169
    %v171 = vpop.f32.mrb[0].mxu0
    %172 = vdwg.mxu0
    %v173 = vmax.f32 %v159, 0.0
    %v174 = vmax.f32 %v162, 0.0
    %v175 = vmax.f32 %v167, 0.0
    %v176 = vmax.f32 %v170, 0.0
    %v177 = vld [vmem:[%s3] sm:$0xf]
    %v178 = vld [vmem:[%s3 + $0x4] sm:$0xf]
    %v179 = vld [vmem:[%s3 + $0x8] sm:$0xf]
    %v180 = vld [vmem:[%s3 + $0xc] sm:$0xf]
    %v181 = vld [vmem:[%s4] sm:$0xff]
    %v182 = vld [vmem:[%s4 + $0x8] sm:$0xff]
    %v183 = vld [vmem:[%s4 + $0x10] sm:$0xff]
    %v184 = vld [vmem:[%s4 + $0x18] sm:$0xff]
    %v185 = vpack.c.bf16 %v174, %v173
    %v186 = vpack.c.bf16 %v176, %v175
    %188 = vset.pattern.permute.xlu0 0
    %189 = vperm.xlu0 %188, %v181
    %v190 = vpop.permute.xlu0 %189
    %193 = vset.pattern.permute.xlu0 0
    %194 = vperm.xlu0 %193, %v182
    %v195 = vpop.permute.xlu0 %194
    %198 = vset.pattern.permute.xlu0 0
    %199 = vperm.xlu0 %198, %v183
    %v200 = vpop.permute.xlu0 %199
    %203 = vset.pattern.permute.xlu0 0
    %204 = vperm.xlu0 %203, %v184
    %v205 = vpop.permute.xlu0 %204
    %v211 = vunpack.c.l.b16 %v177
    %v212 = vunpack.c.l.b16 %v178
    %v213 = vunpack.c.l.b16 %v179
    %v214 = vunpack.c.l.b16 %v180
    %v215 = vpack.c.b16 %v212, %v211
    %v216 = vpack.c.b16 %v214, %v213
    %vm217 = vcmask 261120
    %v219 = vsel %vm217, %v215, 0
    %v222 = vsel %vm217, %v216, 0
    %224 = vmatprep.subr.bf16.mxu0 0
    %225 = vmatpush1.bf16.msra.mxu0 %v185
    %226 = vmatprep.subr.bf16.mxu0 0
    %227 = vmatpush1.bf16.msra.mxu0 %v186
    %228 = vmatprep.subr.bf16.mxu0 0
    %229 = vmatpush1.bf16.msra.mxu0 0
    %230 = vmatprep.subr.bf16.mxu0 0
    %231 = vmatpush1.bf16.msra.mxu0 0
    %232 = vmatprep.subr.bf16.mxu0 0
    %233 = vmatpush1.bf16.msra.mxu0 0
    %234 = vmatprep.subr.bf16.mxu0 0
    %235 = vmatpush1.bf16.msra.mxu0 0
    %236 = vmatprep.subr.bf16.mxu0 0
    %237 = vmatpush1.bf16.msra.mxu0 0
    %238 = vmatprep.subr.bf16.mxu0 0
    %239 = vmatpush1.bf16.msra.mxu0 0
    %240 = vmatprep.subr.bf16.mxu0 0
    %241 = vmatpush1.bf16.msra.mxu0 0
    %242 = vmatprep.subr.bf16.mxu0 0
    %243 = vmatpush1.bf16.msra.mxu0 0
    %244 = vmatprep.subr.bf16.mxu0 0
    %245 = vmatpush1.bf16.msra.mxu0 0
    %246 = vmatprep.subr.bf16.mxu0 0
    %247 = vmatpush1.bf16.msra.mxu0 0
    %248 = vmatprep.subr.bf16.mxu0 0
    %249 = vmatpush1.bf16.msra.mxu0 0
    %250 = vmatprep.subr.bf16.mxu0 0
    %251 = vmatpush1.bf16.msra.mxu0 0
    %252 = vmatprep.subr.bf16.mxu0 0
    %253 = vmatpush1.bf16.msra.mxu0 0
    %254 = vmatprep.subr.bf16.mxu0 0
    %255 = vmatpush1.bf16.msra.mxu0 0
    %256 = vmatprep.mubr.bf16.mxu0 0
    %257 = vmatmul.mubr.bf16.gmra.mrb[0].mxu0 %v219
    %v258 = vpop.f32.mrb[0].mxu0
    %v259 = vadd.f32 %v190, %v258
    %v260 = vpop.f32.mrb[0].mxu0
    %v261 = vpop.f32.mrb[0].mxu0
    %v262 = vadd.f32 %v195, %v261
    %v263 = vpop.f32.mrb[0].mxu0
    %264 = vmatprep.mubr.bf16.mxu0 0
    %265 = vmatmul.mubr.bf16.gmra.mrb[0].mxu0 %v222
    %v266 = vpop.f32.mrb[0].mxu0
    %v267 = vadd.f32 %v200, %v266
    %v268 = vpop.f32.mrb[0].mxu0
    %v269 = vpop.f32.mrb[0].mxu0
    %v270 = vadd.f32 %v205, %v269
    %v271 = vpop.f32.mrb[0].mxu0
    %272 = vdwg.mxu0
    %v273 = vmax.f32 %v259, 0.0
    %v274 = vmax.f32 %v262, 0.0
    %v275 = vmax.f32 %v267, 0.0
    %v276 = vmax.f32 %v270, 0.0
    %v277 = vld [vmem:[%s5] sm:$0xff]
    %v278 = vld [vmem:[%s5 + $0x8] sm:$0xff]
    %v279 = vld [vmem:[%s5 + $0x10] sm:$0xff]
    %v280 = vld [vmem:[%s5 + $0x18] sm:$0xff]
    %v281 = vld [vmem:[#allocation2] sm:$0x1]
    %283 = vset.pattern.permute.xlu0 0
    %284 = vperm.xlu0 %283, %v277
    %v285 = vpop.permute.xlu0 %284
    %288 = vset.pattern.permute.xlu0 0
    %289 = vperm.xlu0 %288, %v278
    %v290 = vpop.permute.xlu0 %289
    %293 = vset.pattern.permute.xlu0 0
    %294 = vperm.xlu0 %293, %v279
    %v295 = vpop.permute.xlu0 %294
    %298 = vset.pattern.permute.xlu0 0
    %299 = vperm.xlu0 %298, %v280
    %v300 = vpop.permute.xlu0 %299
    %v302 = vmul.f32 %v273, %v285
    %v303 = vmul.f32 %v274, %v290
    %v304 = vmul.f32 %v275, %v295
    %v305 = vmul.f32 %v276, %v300
    %v306 = vadd.f32 %v302, %v303
    %v307 = vadd.f32 %v306, %v304
    %v308 = vadd.f32 %v307, %v305
    %v309 = vrot.slane %v308, 4
    %v310 = vadd.f32 %v308, %v309
    %v311 = vrot.slane %v310, 2
    %v312 = vadd.f32 %v310, %v311
    %v313 = vrot.slane %v312, 1
    %v314 = vadd.f32 %v312, %v313
    %316 = vset.pattern.permute.xlu0 0
    %317 = vperm.xlu0 %316, %v281
    %v318 = vpop.permute.xlu0 %317
    %v320 = vlaneseq
    %v321 = vshrl.u32 %v320, 7
    %v322 = vsub.s32 0, %v321
    %v323 = vrot.slane %v318, %v322
    %v324 = vadd.f32 %v314, %v323
    %325 = vst [vmem:[#allocation3] sm:$0x1] %v324
    // Predicated region
    $region30: #{tpu_custom_call.1} parent=1 // pred_check
      _
    $region31: #{tpu_custom_call.1} parent=1 // pred_check_branch
      %327 = sbr.rel (0) target = $region33
    $region32: #{tpu_custom_call.1} parent=1 // pred_region
      %s329 = ssub.s32 16, 16
      %330 = vsyncadd [#allocation4], %s329
      %s332 = sshll.u32 [#allocation3], 4
      %s333 = int_to_ptr.vmem [resolvable:$true] %s332
      %335 = dma.vmem_to_hbm [thread:$0]  %s333, 16, %s7, [#allocation4]
    $region33: #{tpu_custom_call.1} parent=1 // pred_fallthru
      _
    // Predicated region
    $region34: #{tpu_custom_call.1} parent=1 // pred_check
      _
    $region35: #{tpu_custom_call.1} parent=1 // pred_check_branch
      %337 = sbr.rel (0) target = $region37
    $region36: #{tpu_custom_call.1} parent=1 // pred_region
      %338 = dma.done [#allocation4], 16
    $region37: #{tpu_custom_call.1} parent=1 // pred_fallthru
      _
    %339 = vsyncpa [#allocation4], 1

</llo_original>
